<compile_context>
chip_gen: v7x
topology: tpu7x:2x2x1
jax: 0.10.0
libtpu: 0.0.40
codegen_flags: <defaults>
</compile_context>

<pallas_src>
import jax
import jax.numpy as jnp
import numpy as np
from jax import lax
from jax.experimental import pallas as pl
from jax.experimental.pallas import tpu as pltpu

_LANE = 128
_SUBLANE = 8
_CHUNK_GROUPS = 8          # lane-groups per fori_loop iteration (bounded unroll)


def _round_up(v, m):
    return (v + m - 1) // m * m


# --------------------------------------------------------------------------
# Pass 1: per-row (i.e. per (n, c)) streaming sum and sum-of-squares.
# Outputs are lane-dense (rows, 128) partial accumulators resident across the
# M grid axis; the final 128-lane reduction happens on the tiny result in JAX.
# --------------------------------------------------------------------------
def _make_stats_kernel(m_total, tm, tr, groups, chunk, split):
    n_chunks = groups // chunk
    n_acc = 2 if split else 1

    def kernel(x_ref, sum_ref, sumsq_ref):
        j = pl.program_id(1)

        @pl.when(j == 0)
        def _init():
            sum_ref[...] = jnp.zeros_like(sum_ref)
            sumsq_ref[...] = jnp.zeros_like(sumsq_ref)

        def accumulate(masked):
            if masked:
                # Hoisted once per (masked) block; JAX does not CSE broadcasts.
                lane = lax.broadcasted_iota(jnp.int32, (tr, _LANE), 1)
                col0 = j * tm + lane
            else:
                col0 = None

            def load_group(start):
                if isinstance(start, int):
                    xg = x_ref[:, start:start + _LANE]
                else:
                    xg = x_ref[:, pl.ds(pl.multiple_of(start, _LANE), _LANE)]
                xg = xg.astype(jnp.float32)
                if masked:
                    xg = jnp.where(col0 + start < m_total, xg, 0.0)
                return xg

            def chunk_body(c, carry):
                ps = list(carry[:n_acc])
                pq = list(carry[n_acc:])
                for gg in range(chunk):
                    start = c * (chunk * _LANE) + gg * _LANE
                    xg = load_group(start)
                    a = gg % n_acc
                    ps[a] = ps[a] + xg
                    pq[a] = pq[a] + xg * xg
                return tuple(ps) + tuple(pq)

            zero = jnp.zeros((tr, _LANE), jnp.float32)
            init = (zero,) * (2 * n_acc)
            if n_chunks == 1:
                carry = chunk_body(0, init)
            else:
                carry = lax.fori_loop(0, n_chunks, chunk_body, init)

            ps_tot = carry[0]
            pq_tot = carry[n_acc]
            if n_acc == 2:
                ps_tot = ps_tot + carry[1]
                pq_tot = pq_tot + carry[n_acc + 1]
            sum_ref[...] += ps_tot
            sumsq_ref[...] += pq_tot

        if m_total % tm == 0:
            accumulate(False)           # fully aligned: no masking anywhere
        else:
            nm = pl.num_programs(1)

            @pl.when(j < nm - 1)
            def _hot():
                accumulate(False)       # hot tiles: mask-free

            @pl.when(j == nm - 1)
            def _tail():
                accumulate(True)        # ragged tail: lane-masked

    return kernel


# --------------------------------------------------------------------------
# Pass 2: y = x * scale + shift with per-row scale/shift (normalize + affine
# folded into 2 elementwise ops per element).
# --------------------------------------------------------------------------
def _normalize_kernel(x_ref, scale_ref, shift_ref, y_ref):
    x = x_ref[...].astype(jnp.float32)
    y = x * scale_ref[...] + shift_ref[...]
    y_ref[...] = y.astype(y_ref.dtype)


# --------------------------------------------------------------------------
# Wrapper: SwitchNorm3d training forward.
# --------------------------------------------------------------------------
def switch_norm_3d(x, weight, bias, mean_weight, var_weight,
                   running_mean, running_var, *,
                   eps=1e-5, momentum=0.997,
                   max_row_tile=64, target_block_bytes=None):
    """SwitchNorm3d forward (training mode, using_bn=True, moving average).

    x:            (N, C, D, H, W)
    weight, bias: (1, C, 1, 1, 1)
    mean_weight, var_weight: (3,)
    running_mean, running_var: (1, C, 1)   (updated copies are returned)
    Returns (y, new_running_mean, new_running_var).
    """
    N, C, D, H, W = x.shape
    M = D * H * W      # NOTE: M == 1 divides by zero, same as torch.var(unbiased=True)
    NC = N * C

    x2 = x.reshape(NC, M)              # free metadata reshape, no copy
    itemsize = jnp.dtype(x2.dtype).itemsize

    # ---- Generation-aware block / VMEM budget -------------------------------
    try:
        vmem_cap = int(pltpu.get_tpu_info().vmem_capacity_bytes)
    except Exception:
        vmem_cap = 64 * 1024 * 1024    # conservative (v7x-like) fallback
    if target_block_bytes is None:
        # 4 MiB blocks on 128-MiB-VMEM parts (v5e/v6e), 2 MiB on 64-MiB parts.
        target_block_bytes = (4 << 20) if vmem_cap >= (100 << 20) else (2 << 20)
    vmem_limit = int(min(vmem_cap * 5 // 8,
                         max(20 << 20, 8 * target_block_bytes)))

    # ---- Row tile: modest (accumulators stay in few vregs), >= 2 tiles so the
    # "parallel" row axis spans both TensorCores on v7x when N*C allows.
    TR = min(max_row_tile, _round_up(NC, _SUBLANE))
    if NC >= 2 * _SUBLANE:
        TR = min(TR, max(_SUBLANE, (NC // 2) // _SUBLANE * _SUBLANE))
    TR = max(TR, _SUBLANE)

    # ---- Lane tile: as wide as the byte budget allows, multiple of 128,
    # independent of M's factorization (cdiv grid + in-kernel tail mask).
    groups_avail = pl.cdiv(M, _LANE)
    groups_target = max(1, target_block_bytes // (TR * _LANE * itemsize))
    groups = min(groups_avail, groups_target)
    if groups > _CHUNK_GROUPS:
        groups = groups // _CHUNK_GROUPS * _CHUNK_GROUPS
        chunk = _CHUNK_GROUPS
    else:
        chunk = groups
    TM = groups * _LANE

    grid = (pl.cdiv(NC, TR), pl.cdiv(M, TM))
    R_out = grid[0] * TR               # pass-1 stat rows (tiny; sliced to NC)
    split = TR <= 32                   # even/odd accumulator split fits vregs

    # ---- Pass 1: streaming per-row sum / sum-of-squares ---------------------
    stats_kernel = _make_stats_kernel(M, TM, TR, groups, chunk, split)
    sums, sumsqs = pl.pallas_call(
        stats_kernel,
        out_shape=(jax.ShapeDtypeStruct((R_out, _LANE), jnp.float32),
                   jax.ShapeDtypeStruct((R_out, _LANE), jnp.float32)),
        grid_spec=pltpu.PrefetchScalarGridSpec(
            num_scalar_prefetch=0,
            grid=grid,
            in_specs=[pl.BlockSpec((TR, TM), lambda i, j: (i, j))],
            out_specs=[pl.BlockSpec((TR, _LANE), lambda i, j: (i, 0)),
                       pl.BlockSpec((TR, _LANE), lambda i, j: (i, 0))]),
        compiler_params=pltpu.CompilerParams(
            dimension_semantics=("parallel", "arbitrary"),
            vmem_limit_bytes=vmem_limit),
    )(x2)

    # ---- Tiny (N, C) statistics + switchable mixing (parameter-scale glue) --
    f32 = jnp.float32
    s1 = jnp.sum(sums[:NC], axis=-1).reshape(N, C).astype(f32)
    s2 = jnp.sum(sumsqs[:NC], axis=-1).reshape(N, C).astype(f32)
    m = jnp.asarray(M, f32)

    mean_in = s1 / m                                       # (N, C)
    # E[x^2]-E[x]^2 form: can cancel in f32 if |mean| >> std of the data.
    var_in = (s2 - s1 * s1 / m) / (m - 1.0)                # unbiased, like torch.var
    mean_ln = jnp.mean(mean_in, axis=1, keepdims=True)     # (N, 1)
    temp = var_in + mean_in * mean_in
    var_ln = jnp.mean(temp, axis=1, keepdims=True) - mean_ln * mean_ln
    mean_bn = jnp.mean(mean_in, axis=0, keepdims=True)     # (1, C)
    var_bn = jnp.mean(temp, axis=0, keepdims=True) - mean_bn * mean_bn

    mw = jax.nn.softmax(mean_weight.astype(f32))
    vw = jax.nn.softmax(var_weight.astype(f32))

    mean = mw[0] * mean_in + mw[1] * mean_ln + mw[2] * mean_bn     # (N, C)
    var = vw[0] * var_in + vw[1] * var_ln + vw[2] * var_bn         # (N, C)

    w = weight.reshape(1, C).astype(f32)
    b = bias.reshape(1, C).astype(f32)
    inv = 1.0 / jnp.sqrt(var + eps)
    scale = inv * w                                                # (N, C)
    shift = b - mean * scale                                       # (N, C)

    scale_p = scale.reshape(NC, 1)
    shift_p = shift.reshape(NC, 1)

    # ---- Pass 2: tiled y = x * scale + shift (unpadded in/out shapes) -------
    y2 = pl.pallas_call(
        _normalize_kernel,
        out_shape=jax.ShapeDtypeStruct((NC, M), x.dtype),
        grid_spec=pltpu.PrefetchScalarGridSpec(
            num_scalar_prefetch=0,
            grid=grid,
            in_specs=[pl.BlockSpec((TR, TM), lambda i, j: (i, j)),
                      pl.BlockSpec((TR, 1), lambda i, j: (i, 0)),
                      pl.BlockSpec((TR, 1), lambda i, j: (i, 0))],
            out_specs=pl.BlockSpec((TR, TM), lambda i, j: (i, j))),
        compiler_params=pltpu.CompilerParams(
            dimension_semantics=("parallel", "parallel"),
            vmem_limit_bytes=vmem_limit),
    )(x2, scale_p, shift_p)

    y = y2.reshape(N, C, D, H, W)      # free metadata reshape, no copy

    # Buffer-update glue (training + using_moving_average=True).
    mean_bn3 = mean_bn.reshape(1, C, 1)
    var_bn3 = var_bn.reshape(1, C, 1)
    new_running_mean = momentum * running_mean + (1.0 - momentum) * mean_bn3
    new_running_var = momentum * running_var + (1.0 - momentum) * var_bn3

    return y, new_running_mean, new_running_var


# --------------------------------------------------------------------------
# Pure-JAX reference mirroring the PyTorch forward (training, using_bn=True).
# --------------------------------------------------------------------------
def _reference(x, weight, bias, mean_weight, var_weight,
               running_mean, running_var, eps=1e-5, momentum=0.997):
    N, C, D, H, W = x.shape
    xf = x.reshape(N, C, -1).astype(jnp.float32)
    M = xf.shape[-1]
    mean_in = jnp.mean(xf, -1, keepdims=True)
    var_in = jnp.sum((xf - mean_in) ** 2, -1, keepdims=True) / (M - 1)
    mean_ln = jnp.mean(mean_in, 1, keepdims=True)
    temp = var_in + mean_in ** 2
    var_ln = jnp.mean(temp, 1, keepdims=True) - mean_ln ** 2
    mean_bn = jnp.mean(mean_in, 0, keepdims=True)
    var_bn = jnp.mean(temp, 0, keepdims=True) - mean_bn ** 2
    mw = jax.nn.softmax(mean_weight)
    vw = jax.nn.softmax(var_weight)
    mean = mw[0] * mean_in + mw[1] * mean_ln + mw[2] * mean_bn
    var = vw[0] * var_in + vw[1] * var_ln + vw[2] * var_bn
    xn = (xf - mean) / jnp.sqrt(var + eps)
    y = xn.reshape(N, C, D, H, W) * weight + bias
    new_rm = momentum * running_mean + (1 - momentum) * mean_bn.reshape(1, C, 1)
    new_rv = momentum * running_var + (1 - momentum) * var_bn.reshape(1, C, 1)
    return y, new_rm, new_rv


if __name__ == "__main__":
    key = jax.random.PRNGKey(0)

    def run_case(N, C, D, H, W, case_key, **kwargs):
        kx, kw, kb, kmw, kvw = jax.random.split(case_key, 5)
        x = jax.random.normal(kx, (N, C, D, H, W), dtype=jnp.float32)
        weight = jnp.ones((1, C, 1, 1, 1), jnp.float32) \
            + 0.1 * jax.random.normal(kw, (1, C, 1, 1, 1))
        bias = 0.05 * jax.random.normal(kb, (1, C, 1, 1, 1))
        mean_weight = jnp.ones((3,), jnp.float32) + 0.1 * jax.random.normal(kmw, (3,))
        var_weight = jnp.ones((3,), jnp.float32) + 0.1 * jax.random.normal(kvw, (3,))
        running_mean = jnp.zeros((1, C, 1), jnp.float32)
        running_var = jnp.zeros((1, C, 1), jnp.float32)

        y, rm, rv = switch_norm_3d(
            x, weight, bias, mean_weight, var_weight,
            running_mean, running_var, eps=1e-5, momentum=0.997, **kwargs)
        jax.block_until_ready((y, rm, rv))

        y_ref, rm_ref, rv_ref = _reference(
            x, weight, bias, mean_weight, var_weight,
            running_mean, running_var, eps=1e-5, momentum=0.997)
        np.testing.assert_allclose(np.asarray(y), np.asarray(y_ref),
                                   rtol=1e-4, atol=1e-4)
        np.testing.assert_allclose(np.asarray(rm), np.asarray(rm_ref),
                                   rtol=1e-4, atol=1e-5)
        np.testing.assert_allclose(np.asarray(rv), np.asarray(rv_ref),
                                   rtol=1e-4, atol=1e-5)

    k1, k2, k3, k4 = jax.random.split(key, 4)
    # Aligned case: tiny block budget forces a (2, 2) grid -> exercises the
    # resident stat accumulation across M-tiles and multiple row tiles.
    run_case(2, 8, 4, 8, 8, k1, target_block_bytes=4096)
    # Unaligned case (C=3, odd spatial dims, M=105 < 128): exercises the
    # in-kernel lane-mask path and ragged row-edge blocks (no host padding).
    run_case(2, 3, 3, 5, 7, k2)
    # Wide-M case (M=2176): exercises the chunked fori_loop inner loop, a
    # multi-tile M axis, and the masked ragged tail tile.
    run_case(2, 4, 8, 16, 17, k3)
    # Ragged rows (N*C=15) with M=64 < 128: row-edge garbage rows + full mask.
    run_case(3, 5, 2, 4, 8, k4)

    print("KERNEL_OK")
</pallas_src>

<mosaic_0001>
module attributes {stable_mosaic.version = 11 : i64} {
  func.func @kernel(%arg0: i32, %arg1: i32, %arg2: memref<8x128xf32, #tpu.memory_space<vmem>>, %arg3: memref<8x128xf32, #tpu.memory_space<vmem>>, %arg4: memref<8x128xf32, #tpu.memory_space<vmem>>) attributes {dimension_semantics = [#tpu.dimension_semantics<parallel>, #tpu.dimension_semantics<arbitrary>], iteration_bounds = array<i64: 2, 2>, scalar_prefetch = 0 : i64, scratch_operands = 0 : i64, tpu.core_type = #tpu.core_type<tc>, window_params = [{transform_indices = @transform_0, window_bounds = array<i64: 8, 128>}, {transform_indices = @transform_1, window_bounds = array<i64: 8, 128>}, {transform_indices = @transform_2, window_bounds = array<i64: 8, 128>}]} {
    %c0_i32 = arith.constant 0 : i32
    %0 = arith.cmpi eq, %arg1, %c0_i32 : i32
    %1 = arith.extui %0 : i1 to i32
    %c0_i32_0 = arith.constant 0 : i32
    %2 = arith.cmpi ne, %1, %c0_i32_0 : i32
    scf.if %2 {
      %cst_10 = arith.constant 0.000000e+00 : f32
      %16 = vector.broadcast %cst_10 : f32 to vector<8x128xf32>
      %c0_11 = arith.constant 0 : index
      %c0_12 = arith.constant 0 : index
      %17 = vector.load %arg3[%c0_11, %c0_12] : memref<8x128xf32, #tpu.memory_space<vmem>>, vector<8x128xf32>
      tpu.vector_store %arg3[%c0_11, %c0_12], %16 {strides = array<i32>} : memref<8x128xf32, #tpu.memory_space<vmem>>, vector<8x128xf32>,
      %cst_13 = arith.constant 0.000000e+00 : f32
      %18 = vector.broadcast %cst_13 : f32 to vector<8x128xf32>
      %c0_14 = arith.constant 0 : index
      %c0_15 = arith.constant 0 : index
      %19 = vector.load %arg4[%c0_14, %c0_15] : memref<8x128xf32, #tpu.memory_space<vmem>>, vector<8x128xf32>
      tpu.vector_store %arg4[%c0_14, %c0_15], %18 {strides = array<i32>} : memref<8x128xf32, #tpu.memory_space<vmem>>, vector<8x128xf32>,
    } else {
    }
    %cst = arith.constant 0.000000e+00 : f32
    %3 = vector.broadcast %cst : f32 to vector<8x128xf32>
    %c0 = arith.constant 0 : index
    %c0_1 = arith.constant 0 : index
    %4 = vector.load %arg2[%c0, %c0_1] : memref<8x128xf32, #tpu.memory_space<vmem>>, vector<8x128xf32>
    %5 = arith.addf %3, %4 : vector<8x128xf32>
    %6 = arith.mulf %4, %4 : vector<8x128xf32>
    %7 = arith.addf %3, %6 : vector<8x128xf32>
    %8 = arith.addf %5, %3 : vector<8x128xf32>
    %9 = arith.addf %7, %3 : vector<8x128xf32>
    %c0_2 = arith.constant 0 : index
    %c0_3 = arith.constant 0 : index
    %10 = vector.load %arg3[%c0_2, %c0_3] : memref<8x128xf32, #tpu.memory_space<vmem>>, vector<8x128xf32>
    %11 = arith.addf %10, %8 : vector<8x128xf32>
    %c0_4 = arith.constant 0 : index
    %c0_5 = arith.constant 0 : index
    %12 = vector.load %arg3[%c0_4, %c0_5] : memref<8x128xf32, #tpu.memory_space<vmem>>, vector<8x128xf32>
    tpu.vector_store %arg3[%c0_4, %c0_5], %11 {strides = array<i32>} : memref<8x128xf32, #tpu.memory_space<vmem>>, vector<8x128xf32>,
    %c0_6 = arith.constant 0 : index
    %c0_7 = arith.constant 0 : index
    %13 = vector.load %arg4[%c0_6, %c0_7] : memref<8x128xf32, #tpu.memory_space<vmem>>, vector<8x128xf32>
    %14 = arith.addf %13, %9 : vector<8x128xf32>
    %c0_8 = arith.constant 0 : index
    %c0_9 = arith.constant 0 : index
    %15 = vector.load %arg4[%c0_8, %c0_9] : memref<8x128xf32, #tpu.memory_space<vmem>>, vector<8x128xf32>
    tpu.vector_store %arg4[%c0_8, %c0_9], %14 {strides = array<i32>} : memref<8x128xf32, #tpu.memory_space<vmem>>, vector<8x128xf32>,
    return
  }
  func.func @transform_0(%arg0: i32, %arg1: i32) -> (i32, i32) {
    %c0_i32 = arith.constant 0 : i32
    return %arg0, %arg1 : i32, i32
  }
  func.func @transform_1(%arg0: i32, %arg1: i32) -> (i32, i32) {
    %c0_i32 = arith.constant 0 : i32
    %c0_i32_0 = arith.constant 0 : i32
    return %arg0, %c0_i32 : i32, i32
  }
  func.func @transform_2(%arg0: i32, %arg1: i32) -> (i32, i32) {
    %c0_i32 = arith.constant 0 : i32
    %c0_i32_0 = arith.constant 0 : i32
    return %arg0, %c0_i32 : i32, i32
  }
}

</mosaic_0001>

<llo_original>
// kernel: tpu_custom_call.1
$region0: #{tpu_custom_call.1}
  #allocation0 [shape = 'u32[]', space=smem, size = 0x4, offset = 0x4, fixed_abs, tag = 'smem constant byte address 0x4 - core index']
  #allocation1 [shape = 'u32[144,128]{1,0:T(1,128)}', space=vmem, size = 0x12000, scoped, tag = 'internal scratch']
  %s0 = inlined_call_operand.hbm [shape: f32[16,256], index: 0, kind: input, shape index: {}]
  %s1 = inlined_call_operand.hbm [shape: f32[16,128], index: 1, kind: output, shape index: {0}]
  %s2 = inlined_call_operand.hbm [shape: f32[16,128], index: 2, kind: output, shape index: {1}]
  %3 = xla_tuple %s1, %s2
  %s4 = sld [smem:[#allocation0]]
  $region53: #{tpu_custom_call.1} parent=0
    _
  %s6 = ssub.s32 1, %s4
  %s7 = scalar_select 0, %s6, %s4
  $region1: #{tpu_custom_call.1} parent=0
    #allocation2 [shape = 'u8[8192]{0}', space=vmem, size = 0x2000, scoped, tag = 'input window, operand 0']
    #allocation3 [shape = 's32[2]{0}', space=sflag, size = 0x8, scoped, tag = 'scoped memory for tpu_custom_call.1']
    #allocation4 [shape = 's32[2]{0}', space=sflag, size = 0x8, scoped, tag = 'scoped memory for tpu_custom_call.1']
    #allocation5 [shape = 'u8[8192]{0}', space=vmem, size = 0x2000, scoped, tag = 'output window, operand 0']
    #allocation6 [shape = 'u8[8192]{0}', space=vmem, size = 0x2000, scoped, tag = 'output window, operand 1']
    #allocation7 [shape = 's32[2]{0}', space=sflag, size = 0x8, scoped, tag = 'scoped memory for tpu_custom_call.1']
    %8 = vsyncpa [#allocation3], 0
    %s9 = scalar_lea.sflag [#allocation3], 1
    %10 = vsyncpa %s9, 0
    %11 = vsyncpa [#allocation4], 0
    %s12 = scalar_lea.sflag [#allocation4], 1
    %13 = vsyncpa %s12, 0
    %14 = vsyncpa [#allocation7], 0
    %s15 = scalar_lea.sflag [#allocation7], 1
    %16 = vsyncpa %s15, 0
    loop: start=0, step=1, limit=6
    $region2: #{tpu_custom_call.1} parent=1 // loop_pre_header
      _
    $region3: #{tpu_custom_call.1} parent=1 // loop_header
      %s18 = sphi 0, %s22
      %p19 = scmp.ge.s32.totalorder %s18, 6
      %s25 = sphi 0, %s37
      %s26 = sphi 0, %s33
      %s27 = sphi 0, %s25
      %s28 = sphi 0, %s26
      %s29 = sphi 0, %s27
      %s30 = sphi 0, %s28
      %s42 = sphi 0, %s44
      %s45 = sphi 0, %s42
      %s46 = sphi 0, %s45
      %s62 = sphi 0, %s46
      %s68 = sphi 0, %s70
      %s71 = sphi 0, %s68
      %s72 = sphi 0, %s71
      %s88 = sphi 0, %s72
      %s94 = sphi 0, %s96
      %s97 = sphi 0, %s94
      %s98 = sphi 0, %s97
      %s114 = sphi 0, %s98
    $region4: #{tpu_custom_call.1} parent=1 // loop_header_branch
      %21 = sbr.rel (%p19) target = $region8
    $region5: #{tpu_custom_call.1} parent=1 // loop_body
      %s23 = ssub.s32 %s18, 1
      %s24 = ssub.s32 %s18, 2
      %s31 = sadd.s32 1, %s26
      %p32 = scmp.ge.s32.totalorder %s31, 2
      %s33 = scalar_select %p32, 0, %s31
      %s34 = sadd.s32 1, %s25
      %s35 = scalar_select %p32, %s34, %s25
      %p36 = scmp.ge.s32.totalorder %s35, 2
      %s37 = scalar_select %p36, 0, %s35
      %s38 = ssub.s32 %s25, %s37
      %s39 = ssub.s32 %s26, %s33
      %s40 = sor.u32 %s38, %s39
      %p41 = scmp.eq.s32.totalorder %s40, 0
      %s43 = sadd.s32 %s42, 1
      %s44 = scalar_select %p41, %s42, %s43
      %p47 = pneg %p41
      %p48 = scmp.eq.s32.totalorder %s18, 3
      %p49 = por %p47, %p48
      %p50 = scmp.ne.s32.totalorder %s42, %s45
      %p51 = scmp.eq.s32.totalorder %s18, 0
      %p52 = por %p50, %p51
      %p53 = scmp.ne.s32.totalorder %s42, %s45
      %p54 = scmp.eq.s32.totalorder %s23, 3
      %p55 = por %p53, %p54
      %p56 = scmp.ne.s32.totalorder %s45, %s46
      %p57 = scmp.eq.s32.totalorder %s23, 0
      %p58 = por %p56, %p57
      %p59 = scmp.ne.s32.totalorder %s45, %s46
      %p60 = scmp.eq.s32.totalorder %s24, 3
      %p61 = por %p59, %p60
      %p63 = scmp.ne.s32.totalorder %s46, %s62
      %p64 = scmp.eq.s32.totalorder %s24, 0
      %p65 = por %p63, %p64
      %s66 = ssub.s32 %s25, %s37
      %p67 = scmp.eq.s32.totalorder %s66, 0
      %s69 = sadd.s32 %s68, 1
      %s70 = scalar_select %p67, %s68, %s69
      %p73 = pneg %p67
      %p74 = scmp.eq.s32.totalorder %s18, 3
      %p75 = por %p73, %p74
      %p76 = scmp.ne.s32.totalorder %s68, %s71
      %p77 = scmp.eq.s32.totalorder %s18, 0
      %p78 = por %p76, %p77
      %p79 = scmp.ne.s32.totalorder %s68, %s71
      %p80 = scmp.eq.s32.totalorder %s23, 3
      %p81 = por %p79, %p80
      %p82 = scmp.ne.s32.totalorder %s71, %s72
      %p83 = scmp.eq.s32.totalorder %s23, 0
      %p84 = por %p82, %p83
      %p85 = scmp.ne.s32.totalorder %s71, %s72
      %p86 = scmp.eq.s32.totalorder %s24, 3
      %p87 = por %p85, %p86
      %p89 = scmp.ne.s32.totalorder %s72, %s88
      %p90 = scmp.eq.s32.totalorder %s24, 0
      %p91 = por %p89, %p90
      %s92 = ssub.s32 %s25, %s37
      %p93 = scmp.eq.s32.totalorder %s92, 0
      %s95 = sadd.s32 %s94, 1
      %s96 = scalar_select %p93, %s94, %s95
      %p99 = pneg %p93
      %p100 = scmp.eq.s32.totalorder %s18, 3
      %p101 = por %p99, %p100
      %p102 = scmp.ne.s32.totalorder %s94, %s97
      %p103 = scmp.eq.s32.totalorder %s18, 0
      %p104 = por %p102, %p103
      %p105 = scmp.ne.s32.totalorder %s94, %s97
      %p106 = scmp.eq.s32.totalorder %s23, 3
      %p107 = por %p105, %p106
      %p108 = scmp.ne.s32.totalorder %s97, %s98
      %p109 = scmp.eq.s32.totalorder %s23, 0
      %p110 = por %p108, %p109
      %p111 = scmp.ne.s32.totalorder %s97, %s98
      %p112 = scmp.eq.s32.totalorder %s24, 3
      %p113 = por %p111, %p112
      %p115 = scmp.ne.s32.totalorder %s98, %s114
      %p116 = scmp.eq.s32.totalorder %s24, 0
      %p117 = por %p115, %p116
      %p118 = scmp.le.s32.totalorder 1, %s18
      %p119 = scmp.lt.s32.totalorder %s18, 5
      %p120 = pnand %p118, %p119
      %p121 = pneg %p120
      // Predicated region
      $region9: #{tpu_custom_call.1} parent=5 // pred_check
        _
      $region10: #{tpu_custom_call.1} parent=5 // pred_check_branch
        %123 = sbr.rel (%p120) target = $region12
      $region11: #{tpu_custom_call.1} parent=5 // pred_region
        %s124 = ssub.s32 %s18, 1
      $region12: #{tpu_custom_call.1} parent=5 // pred_fallthru
        _
      %p125 = scmp.lt.s32.totalorder %s18, 4
      // Predicated region
      $region13: #{tpu_custom_call.1} parent=5 // pred_check
        %p126 = pneg %p125
      $region14: #{tpu_custom_call.1} parent=5 // pred_check_branch
        %128 = sbr.rel (%p126) target = $region16
      $region15: #{tpu_custom_call.1} parent=5 // pred_region
        // Predicated region
        $region17: #{tpu_custom_call.1} parent=15 // pred_check
          %p129 = pneg %p52
        $region18: #{tpu_custom_call.1} parent=15 // pred_check_branch
          %131 = sbr.rel (%p129) target = $region20
        $region19: #{tpu_custom_call.1} parent=15 // pred_region
          %s132 = sand.u32 %s42, 1
          %s133 = scalar_lea.sflag [#allocation3], %s132
          %s134 = sand.u32 %s42, 1
          %s135 = smul.addr %s134, 8
          %s136 = scalar_lea.vmem [#allocation2], %s135
          %s138 = ssub.s32 128, 128
          %139 = vsyncadd %s133, %s138
          %s140 = smul.addr %s25, 2
          %s141 = sadd.s32 %s26, %s140
          %s142 = smul.addr %s141, 128
          %s143 = scalar_lea.hbm %s0, %s142
          %s145 = sshll.u32 %s136, 4
          %s146 = int_to_ptr.vmem [resolvable:$true] %s145
          %148 = dma.hbm_to_vmem [thread:$0]  %s143, 128, %s146, %s133
        $region20: #{tpu_custom_call.1} parent=15 // pred_fallthru
          _
      $region16: #{tpu_custom_call.1} parent=5 // pred_fallthru
        _
      %p149 = scmp.le.s32.totalorder 1, %s18
      %p150 = scmp.lt.s32.totalorder %s18, 5
      %p151 = pnand %p149, %p150
      %p152 = pneg %p151
      // Predicated region
      $region21: #{tpu_custom_call.1} parent=5 // pred_check
        _
      $region22: #{tpu_custom_call.1} parent=5 // pred_check_branch
        %154 = sbr.rel (%p151) target = $region24
      $region23: #{tpu_custom_call.1} parent=5 // pred_region
        %s155 = ssub.s32 %s18, 1
        %s156 = sand.u32 %s45, 1
        %s157 = scalar_lea.sflag [#allocation3], %s156
        %s158 = sand.u32 %s45, 1
        %s159 = smul.addr %s158, 8
        %s160 = scalar_lea.vmem [#allocation2], %s159
        // Predicated region
        $region25: #{tpu_custom_call.1} parent=23 // pred_check
          %p161 = pneg %p58
        $region26: #{tpu_custom_call.1} parent=23 // pred_check_branch
          %163 = sbr.rel (%p161) target = $region28
        $region27: #{tpu_custom_call.1} parent=23 // pred_region
          %164 = dma.done %s157, 128
        $region28: #{tpu_custom_call.1} parent=23 // pred_fallthru
          _
        %s165 = sand.u32 %s45, 1
        %s166 = scalar_lea.sflag [#allocation3], %s165
        %s167 = sand.u32 %s45, 1
        %s168 = smul.addr %s167, 8
        %s169 = scalar_lea.vmem [#allocation2], %s168
        %p170 = pneg %p58
        %p171 = pneg %p55
        %p172 = pneg %p84
        %p173 = pneg %p81
        %s174 = sand.u32 %s71, 1
        %s175 = scalar_lea.sflag [#allocation4], %s174
        %s176 = sand.u32 %s71, 1
        %s177 = smul.addr %s176, 8
        %s178 = scalar_lea.vmem [#allocation5], %s177
        %p179 = pneg %p110
        %p180 = pneg %p107
        %s181 = sand.u32 %s97, 1
        %s182 = scalar_lea.sflag [#allocation7], %s181
        %s183 = sand.u32 %s97, 1
        %s184 = smul.addr %s183, 8
        %s185 = scalar_lea.vmem [#allocation6], %s184
        %p186 = scmp.eq.s32.totalorder %s28, 0
        // Predicated region
        $region29: #{tpu_custom_call.1} parent=23 // pred_check
          %p187 = pneg %p186
        $region30: #{tpu_custom_call.1} parent=23 // pred_check_branch
          %189 = sbr.rel (%p187) target = $region32
        $region31: #{tpu_custom_call.1} parent=23 // pred_region
          %190 = vst [vmem:[%s178] sm:$0xff] 0.0
          %191 = vst [vmem:[%s185] sm:$0xff] 0.0
        $region32: #{tpu_custom_call.1} parent=23 // pred_fallthru
          _
        %v192 = vld [vmem:[%s160] sm:$0xff]
        %v193 = vadd.f32 %v192, 0.0
        %v194 = vmul.f32 %v192, %v192
        %v195 = vadd.f32 %v194, 0.0
        %v196 = vadd.f32 %v193, 0.0
        %v197 = vadd.f32 %v195, 0.0
        %v198 = vld [vmem:[%s178] sm:$0xff]
        %v199 = vadd.f32 %v198, %v196
        %200 = vst [vmem:[%s178] sm:$0xff] %v199
        %v201 = vld [vmem:[%s185] sm:$0xff]
        %v202 = vadd.f32 %v201, %v197
        %203 = vst [vmem:[%s185] sm:$0xff] %v202
        %s204 = sand.u32 %s71, 1
        %s205 = scalar_lea.sflag [#allocation4], %s204
        %s206 = sand.u32 %s71, 1
        %s207 = smul.addr %s206, 8
        %s208 = scalar_lea.vmem [#allocation5], %s207
        %s209 = sand.u32 %s97, 1
        %s210 = scalar_lea.sflag [#allocation7], %s209
        %s211 = sand.u32 %s97, 1
        %s212 = smul.addr %s211, 8
        %s213 = scalar_lea.vmem [#allocation6], %s212
        // Predicated region
        $region33: #{tpu_custom_call.1} parent=23 // pred_check
          %p214 = pneg %p81
        $region34: #{tpu_custom_call.1} parent=23 // pred_check_branch
          %216 = sbr.rel (%p214) target = $region36
        $region35: #{tpu_custom_call.1} parent=23 // pred_region
          %s218 = ssub.s32 128, 128
          %219 = vsyncadd %s205, %s218
          %s220 = smul.addr %s27, 128
          %s221 = scalar_lea.hbm %s1, %s220
          %s223 = sshll.u32 %s208, 4
          %s224 = int_to_ptr.vmem [resolvable:$true] %s223
          %226 = dma.vmem_to_hbm [thread:$0]  %s224, 128, %s221, %s205
        $region36: #{tpu_custom_call.1} parent=23 // pred_fallthru
          _
        // Predicated region
        $region37: #{tpu_custom_call.1} parent=23 // pred_check
          %p227 = pneg %p107
        $region38: #{tpu_custom_call.1} parent=23 // pred_check_branch
          %229 = sbr.rel (%p227) target = $region40
        $region39: #{tpu_custom_call.1} parent=23 // pred_region
          %s231 = ssub.s32 128, 128
          %232 = vsyncadd %s210, %s231
          %s233 = smul.addr %s27, 128
          %s234 = scalar_lea.hbm %s2, %s233
          %s236 = sshll.u32 %s213, 4
          %s237 = int_to_ptr.vmem [resolvable:$true] %s236
          %239 = dma.vmem_to_hbm [thread:$0]  %s237, 128, %s234, %s210
        $region40: #{tpu_custom_call.1} parent=23 // pred_fallthru
          _
      $region24: #{tpu_custom_call.1} parent=5 // pred_fallthru
        _
      %p240 = scmp.le.s32.totalorder 2, %s18
      // Predicated region
      $region41: #{tpu_custom_call.1} parent=5 // pred_check
        %p241 = pneg %p240
      $region42: #{tpu_custom_call.1} parent=5 // pred_check_branch
        %243 = sbr.rel (%p241) target = $region44
      $region43: #{tpu_custom_call.1} parent=5 // pred_region
        %s244 = ssub.s32 %s18, 2
        // Predicated region
        $region45: #{tpu_custom_call.1} parent=43 // pred_check
          %p245 = pneg %p87
        $region46: #{tpu_custom_call.1} parent=43 // pred_check_branch
          %247 = sbr.rel (%p245) target = $region48
        $region47: #{tpu_custom_call.1} parent=43 // pred_region
          %s248 = sand.u32 %s72, 1
          %s249 = scalar_lea.sflag [#allocation4], %s248
          %s250 = sand.u32 %s72, 1
          %s251 = smul.addr %s250, 8
          %s252 = scalar_lea.vmem [#allocation5], %s251
          %253 = dma.done %s249, 128
        $region48: #{tpu_custom_call.1} parent=43 // pred_fallthru
          _
        // Predicated region
        $region49: #{tpu_custom_call.1} parent=43 // pred_check
          %p254 = pneg %p113
        $region50: #{tpu_custom_call.1} parent=43 // pred_check_branch
          %256 = sbr.rel (%p254) target = $region52
        $region51: #{tpu_custom_call.1} parent=43 // pred_region
          %s257 = sand.u32 %s98, 1
          %s258 = scalar_lea.sflag [#allocation7], %s257
          %s259 = sand.u32 %s98, 1
          %s260 = smul.addr %s259, 8
          %s261 = scalar_lea.vmem [#allocation6], %s260
          %262 = dma.done %s258, 128
        $region52: #{tpu_custom_call.1} parent=43 // pred_fallthru
          _
      $region44: #{tpu_custom_call.1} parent=5 // pred_fallthru
        _
    $region6: #{tpu_custom_call.1} parent=1 // loop_footer
      %s22 = sadd.s32 1, %s18
    $region7: #{tpu_custom_call.1} parent=1 // loop_footer_branch
      %17 = sbr.rel target = $region3
    $region8: #{tpu_custom_call.1} parent=1 // loop_exit
      _
    %263 = vsyncpa [#allocation3], 1
    %s264 = scalar_lea.sflag [#allocation3], 1
    %265 = vsyncpa %s264, 1
    %266 = vsyncpa [#allocation4], 1
    %s267 = scalar_lea.sflag [#allocation4], 1
    %268 = vsyncpa %s267, 1
    %269 = vsyncpa [#allocation7], 1
    %s270 = scalar_lea.sflag [#allocation7], 1
    %271 = vsyncpa %s270, 1

</llo_original>
